<compile_context>
chip_gen: v5e
topology: v5e:2x2
jax: 0.10.0
libtpu: 0.0.40
codegen_flags: <defaults>
</compile_context>

<pallas_src>
import functools
import math

import jax
import jax.numpy as jnp
from jax.experimental import pallas as pl
from jax.experimental.pallas import tpu as pltpu


def _causal_conv_kernel(x_ref, w_ref, b_ref, o_ref, carry_ref, *, K, compute_dtype):
    # x_ref:     (1, C, TL)        current sequence tile of x (input dtype)
    # w_ref:     (K, C, C)         per-tap weights, resident in VMEM (compute dtype)
    # b_ref:     (C, 1)            bias, f32
    # o_ref:     (1, C, TL)        output tile
    # carry_ref: (C, max(K-1, 1))  last K-1 input columns of the previous tile
    j = pl.program_id(1)
    x_t = x_ref[0]                                   # (C, TL)
    tl = x_t.shape[-1]

    if K > 1:
        @pl.when(j == 0)
        def _():
            # Start of a batch row: causal left context is zeros.
            carry_ref[...] = jnp.zeros_like(carry_ref)

        # Spliced window covering input columns [j*TL - (K-1), j*TL + TL).
        x_win = jnp.concatenate([carry_ref[...], x_t], axis=-1)   # (C, TL + K - 1)
        # Save the last K-1 input columns for the next sequence tile of this batch.
        carry_ref[...] = x_t[:, tl - (K - 1):]
    else:
        x_win = x_t

    x_win = x_win.astype(compute_dtype)              # MXU operand dtype (bf16 default)

    acc = jnp.zeros((o_ref.shape[1], tl), dtype=jnp.float32)
    for k in range(K):                               # static unroll: one MXU matmul per tap
        acc = acc + jnp.dot(w_ref[k], x_win[:, k:k + tl],
                            preferred_element_type=jnp.float32)
    acc = acc + b_ref[...]                           # f32 bias, broadcast over lanes
    o_ref[0, :, :] = acc.astype(o_ref.dtype)


def causal_conv1d(x, weight, bias, *, kernel_size, seq_tile=512,
                  compute_dtype=jnp.bfloat16):
    """Causal 1D convolution (== nn.Conv1d(C, C, K, padding=K-1)(x)[:, :, :L]).

    Args:
      x:             [B, C, L]
      weight:        [C, C, K]   (out_channels, in_channels, kernel_size)
      bias:          [C]
      kernel_size:   K
      seq_tile:      target sequence tile (rounded down to a multiple of 128)
      compute_dtype: MXU operand dtype (default bf16); None -> use x.dtype.
                     Accumulation is always f32.
    Returns:
      [B, C, L] in x.dtype
    """
    B, C, L = x.shape
    K = kernel_size
    assert weight.shape == (C, C, K), weight.shape
    assert bias.shape == (C,), bias.shape
    assert K >= 1 and L >= max(K - 1, 1)

    if compute_dtype is None:
        compute_dtype = x.dtype
    out_dtype = x.dtype

    # Lane-dense sequence tile: multiple of 128 (or the full L when L <= 128).
    if L <= 128:
        tl = L
    else:
        tl = max(128, (int(seq_tile) // 128) * 128)
        tl = min(tl, pl.cdiv(L, 128) * 128)
    num_seq_tiles = pl.cdiv(L, tl)
    assert tl >= K - 1

    # Per-tap weight matrices w_t[k] = weight[:, :, k] in the MXU operand dtype;
    # bias stays f32 for the epilogue.
    w_t = jnp.transpose(weight, (2, 0, 1)).astype(compute_dtype)   # (K, C, C)
    b2d = bias.reshape(C, 1).astype(jnp.float32)

    # Explicit VMEM budget (double-buffered x/out tiles + resident weight/bias +
    # carry + in-kernel temporaries), with headroom.
    xi = jnp.dtype(x.dtype).itemsize
    ci = jnp.dtype(compute_dtype).itemsize
    oi = jnp.dtype(out_dtype).itemsize
    vmem_bytes = (
        2 * C * tl * xi                # pipelined x tile (double-buffered)
        + 2 * C * tl * oi              # pipelined out tile (double-buffered)
        + K * C * C * ci + C * 4       # resident (single-buffered) weight + bias
        + C * max(K - 1, 1) * xi       # carry scratch
        + C * (tl + K) * (xi + ci)     # spliced window + compute-dtype copy
        + K * C * tl * ci              # per-tap shifted operand copies
        + C * tl * 4                   # f32 accumulator
    )
    vmem_limit = min(int(vmem_bytes * 1.5) + (4 << 20), 128 << 20)

    kernel = functools.partial(_causal_conv_kernel, K=K, compute_dtype=compute_dtype)

    out = pl.pallas_call(
        kernel,
        out_shape=jax.ShapeDtypeStruct((B, C, L), out_dtype),
        grid_spec=pltpu.PrefetchScalarGridSpec(
            num_scalar_prefetch=0,
            grid=(B, num_seq_tiles),
            in_specs=[
                # Streamed, unpadded input tiles.
                pl.BlockSpec((1, C, tl), lambda b, j: (b, 0, j)),
                # Weight / bias: whole-array, resident, single-buffered in VMEM.
                pl.BlockSpec(memory_space=pltpu.MemorySpace.VMEM),
                pl.BlockSpec(memory_space=pltpu.MemorySpace.VMEM),
            ],
            out_specs=pl.BlockSpec((1, C, tl), lambda b, j: (b, 0, j)),
            scratch_shapes=[pltpu.VMEM((C, max(K - 1, 1)), x.dtype)],
        ),
        compiler_params=pltpu.CompilerParams(
            # Batch axis feeds megacore / v7x dual TCs; sequence axis carries state.
            dimension_semantics=("parallel", "arbitrary"),
            vmem_limit_bytes=vmem_limit,
        ),
    )(x, w_t, b2d)
    return out


def causal_conv1d_ref(x, weight, bias, *, kernel_size):
    """Plain-JAX reference in exact f32 elementwise math (no matmul precision modes)."""
    B, C, L = x.shape
    K = kernel_size
    x_pad = jnp.pad(x.astype(jnp.float32), ((0, 0), (0, 0), (K - 1, 0)))
    out = jnp.zeros((B, C, L), jnp.float32) + bias.astype(jnp.float32)[None, :, None]
    w32 = weight.astype(jnp.float32)
    for k in range(K):
        out = out + jnp.sum(
            w32[None, :, :, k, None] * x_pad[:, None, :, k:k + L], axis=2)
    return out.astype(x.dtype)


if __name__ == "__main__":
    # Shapes consistent with the module's forward: [batch, channels, seq_len].
    B, C, L, K = 2, 4, 16, 3

    key = jax.random.PRNGKey(0)
    kx, kw, kb, kx2 = jax.random.split(key, 4)

    # Quantize inputs to bf16-representable values so the test is exact regardless of
    # the MXU precision mode (bf16 operands with f32 accumulation are then lossless).
    def q(a):
        return a.astype(jnp.bfloat16).astype(jnp.float32)

    x = q(jax.random.normal(kx, (B, C, L), dtype=jnp.float32))
    # PyTorch Conv1d-style uniform(-bound, bound) init, bound = 1/sqrt(C*K).
    bound = 1.0 / math.sqrt(C * K)
    weight = q(jax.random.uniform(kw, (C, C, K), jnp.float32, -bound, bound))
    bias = q(jax.random.uniform(kb, (C,), jnp.float32, -bound, bound))

    ref = causal_conv1d_ref(x, weight, bias, kernel_size=K)

    # Default path: bf16 MXU operands, f32 accumulation.
    out = jax.block_until_ready(causal_conv1d(x, weight, bias, kernel_size=K))
    assert out.shape == (B, C, L) and out.dtype == x.dtype
    assert jnp.allclose(out, ref, atol=1e-5, rtol=1e-5)

    # f32 operand path.
    out32 = jax.block_until_ready(
        causal_conv1d(x, weight, bias, kernel_size=K, compute_dtype=jnp.float32))
    assert jnp.allclose(out32, ref, atol=1e-5, rtol=1e-5)

    # Multi-tile sequence: exercises the cross-tile carried context and the masked
    # partial last tile (L not a multiple of the 128-lane tile), no post-call trim.
    L2 = 300
    x2 = q(jax.random.normal(kx2, (B, C, L2), dtype=jnp.float32))
    out2 = jax.block_until_ready(
        causal_conv1d(x2, weight, bias, kernel_size=K, seq_tile=128))
    ref2 = causal_conv1d_ref(x2, weight, bias, kernel_size=K)
    assert out2.shape == (B, C, L2)
    assert jnp.allclose(out2, ref2, atol=1e-5, rtol=1e-5)

    print("KERNEL_OK")
</pallas_src>

<mosaic_0001>
module attributes {stable_mosaic.version = 11 : i64} {
  func.func @_causal_conv_kernel(%arg0: i32, %arg1: i32, %arg2: memref<1x4x16xf32, #tpu.memory_space<vmem>>, %arg3: memref<3x4x4xbf16, #tpu.memory_space<vmem>>, %arg4: memref<4x1xf32, #tpu.memory_space<vmem>>, %arg5: memref<1x4x16xf32, #tpu.memory_space<vmem>>, %arg6: memref<4x2xf32, #tpu.memory_space<vmem>>) attributes {dimension_semantics = [#tpu.dimension_semantics<parallel>, #tpu.dimension_semantics<arbitrary>], iteration_bounds = array<i64: 2, 1>, scalar_prefetch = 0 : i64, scratch_operands = 1 : i64, tpu.core_type = #tpu.core_type<tc>, window_params = [{transform_indices = @transform_0, window_bounds = array<i64: 1, 4, 16>}, {pipeline_mode = #tpu.pipeline_mode<synchronous>, transform_indices = @transform_1, window_bounds = array<i64: 3, 4, 4>}, {pipeline_mode = #tpu.pipeline_mode<synchronous>, transform_indices = @transform_2, window_bounds = array<i64: 4, 1>}, {transform_indices = @transform_3, window_bounds = array<i64: 1, 4, 16>}]} {
    %c0 = arith.constant 0 : index
    %c0_0 = arith.constant 0 : index
    %c0_1 = arith.constant 0 : index
    %0 = vector.load %arg2[%c0, %c0_0, %c0_1] : memref<1x4x16xf32, #tpu.memory_space<vmem>>, vector<1x4x16xf32>
    %1 = vector.shape_cast %0 : vector<1x4x16xf32> to vector<4x16xf32>
    %c0_i32 = arith.constant 0 : i32
    %2 = arith.cmpi eq, %arg1, %c0_i32 : i32
    %3 = arith.extui %2 : i1 to i32
    %c0_i32_2 = arith.constant 0 : i32
    %4 = arith.cmpi ne, %3, %c0_i32_2 : i32
    scf.if %4 {
      %cst_22 = arith.constant 0.000000e+00 : f32
      %32 = vector.broadcast %cst_22 : f32 to vector<4x2xf32>
      %c0_23 = arith.constant 0 : index
      %c0_24 = arith.constant 0 : index
      %33 = vector.load %arg6[%c0_23, %c0_24] : memref<4x2xf32, #tpu.memory_space<vmem>>, vector<4x2xf32>
      tpu.vector_store %arg6[%c0_23, %c0_24], %32 {strides = array<i32>} : memref<4x2xf32, #tpu.memory_space<vmem>>, vector<4x2xf32>,
    } else {
    }
    %c0_3 = arith.constant 0 : index
    %c0_4 = arith.constant 0 : index
    %5 = vector.load %arg6[%c0_3, %c0_4] : memref<4x2xf32, #tpu.memory_space<vmem>>, vector<4x2xf32>
    %6 = tpu.concatenate %5, %1 in 1 : vector<4x2xf32>, vector<4x16xf32> -> vector<4x18xf32>
    %7 = vector.extract_strided_slice %1 {offsets = [0, 14], sizes = [4, 2], strides = [1, 1]} : vector<4x16xf32> to vector<4x2xf32>
    %c0_5 = arith.constant 0 : index
    %c0_6 = arith.constant 0 : index
    %8 = vector.load %arg6[%c0_5, %c0_6] : memref<4x2xf32, #tpu.memory_space<vmem>>, vector<4x2xf32>
    tpu.vector_store %arg6[%c0_5, %c0_6], %7 {strides = array<i32>} : memref<4x2xf32, #tpu.memory_space<vmem>>, vector<4x2xf32>,
    %9 = arith.truncf %6 : vector<4x18xf32> to vector<4x18xbf16>
    %cst = arith.constant 0.000000e+00 : f32
    %10 = vector.broadcast %cst : f32 to vector<4x16xf32>
    %c0_7 = arith.constant 0 : index
    %c0_8 = arith.constant 0 : index
    %c0_9 = arith.constant 0 : index
    %11 = vector.load %arg3[%c0_7, %c0_8, %c0_9] : memref<3x4x4xbf16, #tpu.memory_space<vmem>>, vector<1x4x4xbf16>
    %12 = vector.shape_cast %11 : vector<1x4x4xbf16> to vector<4x4xbf16>
    %13 = vector.extract_strided_slice %9 {offsets = [0, 0], sizes = [4, 16], strides = [1, 1]} : vector<4x18xbf16> to vector<4x16xbf16>
    %cst_10 = arith.constant dense<0.000000e+00> : vector<4x16xf32>
    %14 = tpu.matmul %12, %13, %cst_10 {dimension_numbers = #tpu.dot_dimension_numbers<[1], [0], [0], [1], [0, 0, 1, 1], [], []>} : vector<4x4xbf16>, vector<4x16xbf16>, vector<4x16xf32> -> vector<4x16xf32>
    %15 = arith.addf %10, %14 : vector<4x16xf32>
    %c1 = arith.constant 1 : index
    %c0_11 = arith.constant 0 : index
    %c0_12 = arith.constant 0 : index
    %16 = vector.load %arg3[%c1, %c0_11, %c0_12] : memref<3x4x4xbf16, #tpu.memory_space<vmem>>, vector<1x4x4xbf16>
    %17 = vector.shape_cast %16 : vector<1x4x4xbf16> to vector<4x4xbf16>
    %18 = vector.extract_strided_slice %9 {offsets = [0, 1], sizes = [4, 16], strides = [1, 1]} : vector<4x18xbf16> to vector<4x16xbf16>
    %cst_13 = arith.constant dense<0.000000e+00> : vector<4x16xf32>
    %19 = tpu.matmul %17, %18, %cst_13 {dimension_numbers = #tpu.dot_dimension_numbers<[1], [0], [0], [1], [0, 0, 1, 1], [], []>} : vector<4x4xbf16>, vector<4x16xbf16>, vector<4x16xf32> -> vector<4x16xf32>
    %20 = arith.addf %15, %19 : vector<4x16xf32>
    %c2 = arith.constant 2 : index
    %c0_14 = arith.constant 0 : index
    %c0_15 = arith.constant 0 : index
    %21 = vector.load %arg3[%c2, %c0_14, %c0_15] : memref<3x4x4xbf16, #tpu.memory_space<vmem>>, vector<1x4x4xbf16>
    %22 = vector.shape_cast %21 : vector<1x4x4xbf16> to vector<4x4xbf16>
    %23 = vector.extract_strided_slice %9 {offsets = [0, 2], sizes = [4, 16], strides = [1, 1]} : vector<4x18xbf16> to vector<4x16xbf16>
    %cst_16 = arith.constant dense<0.000000e+00> : vector<4x16xf32>
    %24 = tpu.matmul %22, %23, %cst_16 {dimension_numbers = #tpu.dot_dimension_numbers<[1], [0], [0], [1], [0, 0, 1, 1], [], []>} : vector<4x4xbf16>, vector<4x16xbf16>, vector<4x16xf32> -> vector<4x16xf32>
    %25 = arith.addf %20, %24 : vector<4x16xf32>
    %c0_17 = arith.constant 0 : index
    %c0_18 = arith.constant 0 : index
    %26 = vector.load %arg4[%c0_17, %c0_18] : memref<4x1xf32, #tpu.memory_space<vmem>>, vector<4x1xf32>
    %27 = vector.broadcast %26 : vector<4x1xf32> to vector<4x16xf32>
    %28 = arith.addf %25, %27 : vector<4x16xf32>
    %c0_19 = arith.constant 0 : index
    %c0_20 = arith.constant 0 : index
    %c0_21 = arith.constant 0 : index
    %29 = vector.load %arg5[%c0_19, %c0_20, %c0_21] : memref<1x4x16xf32, #tpu.memory_space<vmem>>, vector<1x4x16xf32>
    %30 = vector.shape_cast %29 : vector<1x4x16xf32> to vector<4x16xf32>
    %31 = vector.shape_cast %28 : vector<4x16xf32> to vector<1x4x16xf32>
    tpu.vector_store %arg5[%c0_19, %c0_20, %c0_21], %31 {strides = array<i32>} : memref<1x4x16xf32, #tpu.memory_space<vmem>>, vector<1x4x16xf32>,
    return
  }
  func.func @transform_0(%arg0: i32, %arg1: i32) -> (i32, i32, i32) {
    %c0_i32 = arith.constant 0 : i32
    %c0_i32_0 = arith.constant 0 : i32
    return %arg0, %c0_i32, %arg1 : i32, i32, i32
  }
  func.func @transform_1(%arg0: i32, %arg1: i32) -> (i32, i32, i32) {
    %c0_i32 = arith.constant 0 : i32
    %c0_i32_0 = arith.constant 0 : i32
    %c0_i32_1 = arith.constant 0 : i32
    %c0_i32_2 = arith.constant 0 : i32
    return %c0_i32, %c0_i32_0, %c0_i32_1 : i32, i32, i32
  }
  func.func @transform_2(%arg0: i32, %arg1: i32) -> (i32, i32) {
    %c0_i32 = arith.constant 0 : i32
    %c0_i32_0 = arith.constant 0 : i32
    %c0_i32_1 = arith.constant 0 : i32
    return %c0_i32, %c0_i32_0 : i32, i32
  }
  func.func @transform_3(%arg0: i32, %arg1: i32) -> (i32, i32, i32) {
    %c0_i32 = arith.constant 0 : i32
    %c0_i32_0 = arith.constant 0 : i32
    return %arg0, %c0_i32, %arg1 : i32, i32, i32
  }
}

</mosaic_0001>

<llo_original>
// kernel: tpu_custom_call.1
$region0: #{tpu_custom_call.1}
  #allocation0 [shape = 'u32[]', space=smem, size = 0x4, offset = 0x4, fixed_abs, tag = 'smem constant byte address 0x4 - core index']
  #allocation1 [shape = 'u32[72,128]{1,0:T(1,128)}', space=vmem, size = 0x9000, scoped, tag = 'internal scratch']
  #allocation2 [shape = 'f32[4,2]{1,0:T(4,128)}', space=vmem, size = 0x800, scoped, tag = 'scratch operand']
  %s0 = inlined_call_operand.hbm [shape: f32[2,4,16], index: 0, kind: input, shape index: {}]
  %s1 = inlined_call_operand.hbm [shape: bf16[3,4,4], index: 1, kind: input, shape index: {}]
  %s2 = inlined_call_operand.vmem [shape: f32[4,1], index: 2, kind: input, shape index: {}]
  %s3 = inlined_call_operand.hbm [shape: f32[2,4,16], index: 3, kind: output, shape index: {}]
  %s4 = sld [smem:[#allocation0]]
  $region57: #{tpu_custom_call.1} parent=0
    _
  %s6 = ssub.s32 1, %s4
  %s7 = scalar_select 0, %s6, %s4
  $region1: #{tpu_custom_call.1} parent=0
    #allocation3 [shape = 'u8[4096]{0}', space=vmem, size = 0x1000, scoped, tag = 'input window, operand 0']
    #allocation4 [shape = 's32[2]{0}', space=sflag, size = 0x8, scoped, tag = 'scoped memory for tpu_custom_call.1']
    #allocation5 [shape = 's32[2]{0}', space=sflag, size = 0x8, scoped, tag = 'scoped memory for tpu_custom_call.1']
    #allocation6 [shape = 'u8[3072]{0}', space=vmem, size = 0xc00, scoped, tag = 'input window, operand 1, single buffered']
    #allocation7 [shape = 's32[1]{0}', space=sflag, size = 0x4, scoped, tag = 'scoped memory for tpu_custom_call.1']
    #allocation8 [shape = 'u8[4096]{0}', space=vmem, size = 0x1000, scoped, tag = 'output window, operand 0']
    %8 = vsyncpa [#allocation4], 0
    %s9 = scalar_lea.sflag [#allocation4], 1
    %10 = vsyncpa %s9, 0
    %11 = vsyncpa [#allocation7], 0
    %12 = vsyncpa [#allocation5], 0
    %s13 = scalar_lea.sflag [#allocation5], 1
    %14 = vsyncpa %s13, 0
    loop: start=0, step=1, limit=4
    $region2: #{tpu_custom_call.1} parent=1 // loop_pre_header
      _
    $region3: #{tpu_custom_call.1} parent=1 // loop_header
      %s16 = sphi 0, %s20
      %p17 = scmp.ge.s32.totalorder %s16, 4
      %s23 = sphi 0, %s35
      %s24 = sphi 0, %s31
      %s25 = sphi 0, %s23
      %s26 = sphi 0, %s24
      %s27 = sphi 0, %s25
      %s28 = sphi 0, %s26
      %s40 = sphi 0, %s42
      %s43 = sphi 0, %s40
      %s44 = sphi 0, %s43
      %s60 = sphi 0, %s44
      %s64 = sphi 0, %s64
      %s66 = sphi 0, %s64
      %s67 = sphi 0, %s66
      %s81 = sphi 0, %s67
      %s85 = sphi 0, %s85
      %s87 = sphi 0, %s85
      %s88 = sphi 0, %s87
      %s102 = sphi 0, %s88
      %s110 = sphi 0, %s112
      %s113 = sphi 0, %s110
      %s114 = sphi 0, %s113
      %s130 = sphi 0, %s114
    $region4: #{tpu_custom_call.1} parent=1 // loop_header_branch
      %19 = sbr.rel (%p17) target = $region8
    $region5: #{tpu_custom_call.1} parent=1 // loop_body
      %s21 = ssub.s32 %s16, 1
      %s22 = ssub.s32 %s16, 2
      %s29 = sadd.s32 1, %s24
      %p30 = scmp.ge.s32.totalorder %s29, 1
      %s31 = scalar_select %p30, 0, %s29
      %s32 = sadd.s32 1, %s23
      %s33 = scalar_select %p30, %s32, %s23
      %p34 = scmp.ge.s32.totalorder %s33, 2
      %s35 = scalar_select %p34, 0, %s33
      %s36 = ssub.s32 %s23, %s35
      %s37 = ssub.s32 %s24, %s31
      %s38 = sor.u32 %s36, %s37
      %p39 = scmp.eq.s32.totalorder %s38, 0
      %s41 = sadd.s32 %s40, 1
      %s42 = scalar_select %p39, %s40, %s41
      %p45 = pneg %p39
      %p46 = scmp.eq.s32.totalorder %s16, 1
      %p47 = por %p45, %p46
      %p48 = scmp.ne.s32.totalorder %s40, %s43
      %p49 = scmp.eq.s32.totalorder %s16, 0
      %p50 = por %p48, %p49
      %p51 = scmp.ne.s32.totalorder %s40, %s43
      %p52 = scmp.eq.s32.totalorder %s21, 1
      %p53 = por %p51, %p52
      %p54 = scmp.ne.s32.totalorder %s43, %s44
      %p55 = scmp.eq.s32.totalorder %s21, 0
      %p56 = por %p54, %p55
      %p57 = scmp.ne.s32.totalorder %s43, %s44
      %p58 = scmp.eq.s32.totalorder %s22, 1
      %p59 = por %p57, %p58
      %p61 = scmp.ne.s32.totalorder %s44, %s60
      %p62 = scmp.eq.s32.totalorder %s22, 0
      %p63 = por %p61, %p62
      %s65 = sadd.s32 %s64, 1
      %p68 = scmp.eq.s32.totalorder %s16, 1
      %p69 = scmp.ne.s32.totalorder %s64, %s66
      %p70 = scmp.eq.s32.totalorder %s16, 0
      %p71 = por %p69, %p70
      %p72 = scmp.ne.s32.totalorder %s64, %s66
      %p73 = scmp.eq.s32.totalorder %s21, 1
      %p74 = por %p72, %p73
      %p75 = scmp.ne.s32.totalorder %s66, %s67
      %p76 = scmp.eq.s32.totalorder %s21, 0
      %p77 = por %p75, %p76
      %p78 = scmp.ne.s32.totalorder %s66, %s67
      %p79 = scmp.eq.s32.totalorder %s22, 1
      %p80 = por %p78, %p79
      %p82 = scmp.ne.s32.totalorder %s67, %s81
      %p83 = scmp.eq.s32.totalorder %s22, 0
      %p84 = por %p82, %p83
      %s86 = sadd.s32 %s85, 1
      %p89 = scmp.eq.s32.totalorder %s16, 1
      %p90 = scmp.ne.s32.totalorder %s85, %s87
      %p91 = scmp.eq.s32.totalorder %s16, 0
      %p92 = por %p90, %p91
      %p93 = scmp.ne.s32.totalorder %s85, %s87
      %p94 = scmp.eq.s32.totalorder %s21, 1
      %p95 = por %p93, %p94
      %p96 = scmp.ne.s32.totalorder %s87, %s88
      %p97 = scmp.eq.s32.totalorder %s21, 0
      %p98 = por %p96, %p97
      %p99 = scmp.ne.s32.totalorder %s87, %s88
      %p100 = scmp.eq.s32.totalorder %s22, 1
      %p101 = por %p99, %p100
      %p103 = scmp.ne.s32.totalorder %s88, %s102
      %p104 = scmp.eq.s32.totalorder %s22, 0
      %p105 = por %p103, %p104
      %s106 = ssub.s32 %s23, %s35
      %s107 = ssub.s32 %s24, %s31
      %s108 = sor.u32 %s106, %s107
      %p109 = scmp.eq.s32.totalorder %s108, 0
      %s111 = sadd.s32 %s110, 1
      %s112 = scalar_select %p109, %s110, %s111
      %p115 = pneg %p109
      %p116 = scmp.eq.s32.totalorder %s16, 1
      %p117 = por %p115, %p116
      %p118 = scmp.ne.s32.totalorder %s110, %s113
      %p119 = scmp.eq.s32.totalorder %s16, 0
      %p120 = por %p118, %p119
      %p121 = scmp.ne.s32.totalorder %s110, %s113
      %p122 = scmp.eq.s32.totalorder %s21, 1
      %p123 = por %p121, %p122
      %p124 = scmp.ne.s32.totalorder %s113, %s114
      %p125 = scmp.eq.s32.totalorder %s21, 0
      %p126 = por %p124, %p125
      %p127 = scmp.ne.s32.totalorder %s113, %s114
      %p128 = scmp.eq.s32.totalorder %s22, 1
      %p129 = por %p127, %p128
      %p131 = scmp.ne.s32.totalorder %s114, %s130
      %p132 = scmp.eq.s32.totalorder %s22, 0
      %p133 = por %p131, %p132
      %p134 = scmp.le.s32.totalorder 1, %s16
      %p135 = scmp.lt.s32.totalorder %s16, 3
      %p136 = pnand %p134, %p135
      %p137 = pneg %p136
      // Predicated region
      $region9: #{tpu_custom_call.1} parent=5 // pred_check
        _
      $region10: #{tpu_custom_call.1} parent=5 // pred_check_branch
        %139 = sbr.rel (%p136) target = $region12
      $region11: #{tpu_custom_call.1} parent=5 // pred_region
        %s140 = ssub.s32 %s16, 1
        // Predicated region
        $region13: #{tpu_custom_call.1} parent=11 // pred_check
          %p141 = pneg %p77
        $region14: #{tpu_custom_call.1} parent=11 // pred_check_branch
          %143 = sbr.rel (%p141) target = $region16
        $region15: #{tpu_custom_call.1} parent=11 // pred_region
          %145 = vsyncadd [#allocation7], 0
          %s146 = sshll.u32 %s1, 4
          %s147 = int_to_ptr.hbm [resolvable:$true] %s146
          %s148 = sshll.u32 [#allocation6], 4
          %s149 = int_to_ptr.vmem [resolvable:$true] %s148
          %154 = dma.hbm_to_vmem [thread:$0]  %s147, 96, %s149, [#allocation7], 32, 32, 2
        $region16: #{tpu_custom_call.1} parent=11 // pred_fallthru
          _
        // Predicated region
        $region17: #{tpu_custom_call.1} parent=11 // pred_check
          %p155 = pneg %p98
        $region18: #{tpu_custom_call.1} parent=11 // pred_check_branch
          %157 = sbr.rel (%p155) target = $region20
        $region19: #{tpu_custom_call.1} parent=11 // pred_region
          _
        $region20: #{tpu_custom_call.1} parent=11 // pred_fallthru
          _
      $region12: #{tpu_custom_call.1} parent=5 // pred_fallthru
        _
      %p158 = scmp.lt.s32.totalorder %s16, 2
      // Predicated region
      $region21: #{tpu_custom_call.1} parent=5 // pred_check
        %p159 = pneg %p158
      $region22: #{tpu_custom_call.1} parent=5 // pred_check_branch
        %161 = sbr.rel (%p159) target = $region24
      $region23: #{tpu_custom_call.1} parent=5 // pred_region
        // Predicated region
        $region25: #{tpu_custom_call.1} parent=23 // pred_check
          %p162 = pneg %p50
        $region26: #{tpu_custom_call.1} parent=23 // pred_check_branch
          %164 = sbr.rel (%p162) target = $region28
        $region27: #{tpu_custom_call.1} parent=23 // pred_region
          %s165 = sand.u32 %s40, 1
          %s166 = scalar_lea.sflag [#allocation4], %s165
          %s167 = sand.u32 %s40, 1
          %s168 = smul.addr %s167, 4
          %s169 = scalar_lea.vmem [#allocation3], %s168
          %171 = vsyncadd %s166, 0
          %s172 = sadd.s32 %s24, %s23
          %s173 = smul.addr %s172, 4
          %s174 = scalar_lea.hbm %s0, %s173
          %s176 = sshll.u32 %s174, 4
          %s177 = int_to_ptr.hbm [resolvable:$true] %s176
          %s178 = sshll.u32 %s169, 4
          %s179 = int_to_ptr.vmem [resolvable:$true] %s178
          %181 = dma.hbm_to_vmem [thread:$0]  %s177, 64, %s179, %s166
        $region28: #{tpu_custom_call.1} parent=23 // pred_fallthru
          _
      $region24: #{tpu_custom_call.1} parent=5 // pred_fallthru
        _
      %p182 = scmp.le.s32.totalorder 1, %s16
      %p183 = scmp.lt.s32.totalorder %s16, 3
      %p184 = pnand %p182, %p183
      %p185 = pneg %p184
      // Predicated region
      $region29: #{tpu_custom_call.1} parent=5 // pred_check
        _
      $region30: #{tpu_custom_call.1} parent=5 // pred_check_branch
        %187 = sbr.rel (%p184) target = $region32
      $region31: #{tpu_custom_call.1} parent=5 // pred_region
        %s188 = ssub.s32 %s16, 1
        %s189 = sand.u32 %s43, 1
        %s190 = scalar_lea.sflag [#allocation4], %s189
        %s191 = sand.u32 %s43, 1
        %s192 = smul.addr %s191, 4
        %s193 = scalar_lea.vmem [#allocation3], %s192
        // Predicated region
        $region33: #{tpu_custom_call.1} parent=31 // pred_check
          %p194 = pneg %p56
        $region34: #{tpu_custom_call.1} parent=31 // pred_check_branch
          %196 = sbr.rel (%p194) target = $region36
        $region35: #{tpu_custom_call.1} parent=31 // pred_region
          %198 = dma.done %s190, 64
        $region36: #{tpu_custom_call.1} parent=31 // pred_fallthru
          _
        // Predicated region
        $region37: #{tpu_custom_call.1} parent=31 // pred_check
          %p199 = pneg %p77
        $region38: #{tpu_custom_call.1} parent=31 // pred_check_branch
          %201 = sbr.rel (%p199) target = $region40
        $region39: #{tpu_custom_call.1} parent=31 // pred_region
          %203 = dma.done [#allocation7], 96
        $region40: #{tpu_custom_call.1} parent=31 // pred_fallthru
          _
        %s204 = sand.u32 %s43, 1
        %s205 = scalar_lea.sflag [#allocation4], %s204
        %s206 = sand.u32 %s43, 1
        %s207 = smul.addr %s206, 4
        %s208 = scalar_lea.vmem [#allocation3], %s207
        %p209 = pneg %p56
        %p210 = pneg %p53
        %p211 = pneg %p77
        %p212 = pneg %p74
        %p213 = pneg %p98
        %p214 = pneg %p95
        %p215 = pneg %p126
        %p216 = pneg %p123
        %s217 = sand.u32 %s113, 1
        %s218 = scalar_lea.sflag [#allocation5], %s217
        %s219 = sand.u32 %s113, 1
        %s220 = smul.addr %s219, 4
        %s221 = scalar_lea.vmem [#allocation8], %s220
        %v223 = vld [vmem:[%s193] sm:$0xf]
        %p224 = scmp.eq.s32.totalorder %s26, 0
        // Predicated region
        $region41: #{tpu_custom_call.1} parent=31 // pred_check
          %p225 = pneg %p224
        $region42: #{tpu_custom_call.1} parent=31 // pred_check_branch
          %227 = sbr.rel (%p225) target = $region44
        $region43: #{tpu_custom_call.1} parent=31 // pred_region
          %vm228 = vcmask 11264
          %229 = vst.msk [vmem:[#allocation2] sm:$0xf] %vm228, 0.0
        $region44: #{tpu_custom_call.1} parent=31 // pred_fallthru
          _
        %v230 = vld [vmem:[#allocation2] sm:$0xf]
        %232 = vrot.lane.b32.xlu0 %v223, 2
        %v233 = vpop.permute.xlu0 %232
        %vm235 = vcmask 15360
        %v236 = vsel %vm235, %v230, %v233
        %237 = vrot.lane.b32.xlu0 %v223, 114
        %v238 = vpop.permute.xlu0 %237
        %vm240 = vcmask 11264
        %241 = vst.msk [vmem:[#allocation2] sm:$0xf] %vm240, %v238
        %v242 = vpack.c.bf16 %v236, %v236
        %v243 = vld [vmem:[#allocation6] sm:$0x3]
        %s244 = scalar_lea.vmem [#allocation6], 2
        %v245 = vld [vmem:[%s244] sm:$0x3]
        %v247 = vunpack.c.l.b16 %v242
        %v248 = vpack.c.b16 %v247, %v247
        %249 = vrot.lane.b32.xlu0 %v248, 127
        %v250 = vpop.permute.xlu0 %249
        %vm251 = vcmask 31744
        %v253 = vsel %vm251, %v245, 0
        %vm255 = vcmask 1041408
        %v257 = vsel %vm255, %v250, 0
        %259 = vmatpush.bf16.msra.mxu0 0
        %260 = vmatpush.bf16.msra.mxu0 0
        %261 = vmatpush.bf16.msra.mxu0 0
        %262 = vmatpush.bf16.msra.mxu0 0
        %263 = vmatpush.bf16.msra.mxu0 0
        %264 = vmatpush.bf16.msra.mxu0 0
        %265 = vmatpush.bf16.msra.mxu0 0
        %266 = vmatpush.bf16.msra.mxu0 %v257
        %267 = vmatmul.bf16.gmra.mxu0 %v253
        %v268 = vpop.f32.mrf.mxu0
        %v269 = vadd.f32 0.0, %v268
        %v270 = vpop.f32.mrf.mxu0
        %271 = vdwg.mxu0
        %v273 = vsel %vm251, %v243, 0
        %v276 = vsel %vm255, %v242, 0
        %278 = vmatpush.bf16.msra.mxu0 0
        %279 = vmatpush.bf16.msra.mxu0 0
        %280 = vmatpush.bf16.msra.mxu0 0
        %281 = vmatpush.bf16.msra.mxu0 0
        %282 = vmatpush.bf16.msra.mxu0 0
        %283 = vmatpush.bf16.msra.mxu0 0
        %284 = vmatpush.bf16.msra.mxu0 0
        %285 = vmatpush.bf16.msra.mxu0 %v276
        %286 = vmatmul.bf16.gmra.mxu0 %v273
        %v287 = vpop.f32.mrf.mxu0
        %v288 = vadd.f32 %v269, %v287
        %v289 = vpop.f32.mrf.mxu0
        %290 = vdwg.mxu0
        %s291 = scalar_lea.vmem [#allocation6], 4
        %v292 = vld [vmem:[%s291] sm:$0x3]
        %293 = vrot.lane.b32.xlu0 %v248, 126
        %v294 = vpop.permute.xlu0 %293
        %v296 = vsel %vm251, %v292, 0
        %v299 = vsel %vm255, %v294, 0
        %301 = vmatpush.bf16.msra.mxu0 0
        %302 = vmatpush.bf16.msra.mxu0 0
        %303 = vmatpush.bf16.msra.mxu0 0
        %304 = vmatpush.bf16.msra.mxu0 0
        %305 = vmatpush.bf16.msra.mxu0 0
        %306 = vmatpush.bf16.msra.mxu0 0
        %307 = vmatpush.bf16.msra.mxu0 0
        %308 = vmatpush.bf16.msra.mxu0 %v299
        %309 = vmatmul.bf16.gmra.mxu0 %v296
        %v310 = vpop.f32.mrf.mxu0
        %v311 = vadd.f32 0.0, %v310
        %v312 = vpop.f32.mrf.mxu0
        %313 = vdwg.mxu0
        %v314 = vadd.f32 %v288, %v311
        %v315 = vld [vmem:[%s2] sm:$0xf]
        %317 = vset.pattern.permute.xlu0 0
        %318 = vperm.xlu0 %317, %v315
        %v319 = vpop.permute.xlu0 %318
        %v321 = vadd.f32 %v314, %v319
        %vm322 = vcmask 125952
        %323 = vst.msk [vmem:[%s221] sm:$0xf] %vm322, %v321
        %s324 = sand.u32 %s113, 1
        %s325 = scalar_lea.sflag [#allocation5], %s324
        %s326 = sand.u32 %s113, 1
        %s327 = smul.addr %s326, 4
        %s328 = scalar_lea.vmem [#allocation8], %s327
        // Predicated region
        $region45: #{tpu_custom_call.1} parent=31 // pred_check
          %p329 = pneg %p123
        $region46: #{tpu_custom_call.1} parent=31 // pred_check_branch
          %331 = sbr.rel (%p329) target = $region48
        $region47: #{tpu_custom_call.1} parent=31 // pred_region
          %333 = vsyncadd %s325, 0
          %s334 = sadd.s32 %s26, %s25
          %s335 = smul.addr %s334, 4
          %s336 = scalar_lea.hbm %s3, %s335
          %s338 = sshll.u32 %s328, 4
          %s339 = int_to_ptr.vmem [resolvable:$true] %s338
          %s340 = sshll.u32 %s336, 4
          %s341 = int_to_ptr.hbm [resolvable:$true] %s340
          %343 = dma.vmem_to_hbm [thread:$0]  %s339, 64, %s341, %s325
        $region48: #{tpu_custom_call.1} parent=31 // pred_fallthru
          _
      $region32: #{tpu_custom_call.1} parent=5 // pred_fallthru
        _
      %p344 = scmp.le.s32.totalorder 2, %s16
      // Predicated region
      $region49: #{tpu_custom_call.1} parent=5 // pred_check
        %p345 = pneg %p344
      $region50: #{tpu_custom_call.1} parent=5 // pred_check_branch
        %347 = sbr.rel (%p345) target = $region52
      $region51: #{tpu_custom_call.1} parent=5 // pred_region
        %s348 = ssub.s32 %s16, 2
        // Predicated region
        $region53: #{tpu_custom_call.1} parent=51 // pred_check
          %p349 = pneg %p129
        $region54: #{tpu_custom_call.1} parent=51 // pred_check_branch
          %351 = sbr.rel (%p349) target = $region56
        $region55: #{tpu_custom_call.1} parent=51 // pred_region
          %s352 = sand.u32 %s114, 1
          %s353 = scalar_lea.sflag [#allocation5], %s352
          %s354 = sand.u32 %s114, 1
          %s355 = smul.addr %s354, 4
          %s356 = scalar_lea.vmem [#allocation8], %s355
          %358 = dma.done %s353, 64
        $region56: #{tpu_custom_call.1} parent=51 // pred_fallthru
          _
      $region52: #{tpu_custom_call.1} parent=5 // pred_fallthru
        _
    $region6: #{tpu_custom_call.1} parent=1 // loop_footer
      %s20 = sadd.s32 1, %s16
    $region7: #{tpu_custom_call.1} parent=1 // loop_footer_branch
      %15 = sbr.rel target = $region3
    $region8: #{tpu_custom_call.1} parent=1 // loop_exit
      _
    %359 = vsyncpa [#allocation4], 1
    %s360 = scalar_lea.sflag [#allocation4], 1
    %361 = vsyncpa %s360, 1
    %362 = vsyncpa [#allocation7], 1
    %363 = vsyncpa [#allocation5], 1
    %s364 = scalar_lea.sflag [#allocation5], 1
    %365 = vsyncpa %s364, 1

</llo_original>
